<compile_context>
chip_gen: v7x
topology: tpu7x:2x2x1
jax: 0.10.0
libtpu: 0.0.40
codegen_flags: <defaults>
</compile_context>

<pallas_src>
import jax
import jax.numpy as jnp
from jax.experimental import pallas as pl
from jax.experimental.pallas import tpu as pltpu


# --------------------------------------------------------------------------
# Kernels
# --------------------------------------------------------------------------
def _gru_kernel_fullk(xh_ref, w_ref, b_ref, o_ref):
    """Grid (M tiles, N tiles): whole contraction (K = 2D) in one MXU pass."""
    a = jnp.maximum(xh_ref[...], 0)                       # relu, weight dtype
    o_ref[...] = (
        jnp.dot(a, w_ref[...], preferred_element_type=jnp.float32)
        + b_ref[...]
    ).astype(o_ref.dtype)


def _gru_kernel_ktiled(xh_ref, w_ref, b_ref, o_ref):
    """Grid (M tiles, N tiles, K tiles), K last.  Accumulate directly into the
    f32 output block (VMEM-resident across k); bias folded into the init."""
    @pl.when(pl.program_id(2) == 0)
    def _init():
        o_ref[...] = jnp.broadcast_to(b_ref[...], o_ref.shape).astype(o_ref.dtype)

    a = jnp.maximum(xh_ref[...], 0)
    o_ref[...] += jnp.dot(a, w_ref[...], preferred_element_type=jnp.float32)


# --------------------------------------------------------------------------
# Parameter fusion (call ONCE, outside any time-step loop)
# --------------------------------------------------------------------------
def fuse_gru_params(w_ih, b_ih, w_hh, b_hh, weight_dtype=jnp.bfloat16):
    """w_ih, w_hh: (D, D) pre-transposed (y = x @ W + b); b_*: (1, D).
    Returns (w_fused (2D, D) in weight_dtype, b_fused (1, D) f32)."""
    w_fused = jnp.concatenate([w_ih, w_hh], axis=0).astype(weight_dtype)
    b_fused = (b_ih + b_hh).astype(jnp.float32)
    return w_fused, b_fused


# --------------------------------------------------------------------------
# Tile selection
# --------------------------------------------------------------------------
def _choose_tiles(N, D, K, act_bytes):
    # M tile: cover the whole batch when it fits -> weights stream from HBM
    # exactly once (the dominant traffic term at GRU batch sizes).
    tm = N if N <= 512 else 512
    # Out-feature tile: large and lane-aligned.
    tn = D if D <= 1024 else 1024
    # v7x dual-TC: if the batch collapsed to a single M tile, split the
    # out-feature axis in two (still a multiple of 128) so both cores work.
    if pl.cdiv(N, tm) == 1 and tn == D and D % 256 == 0:
        tn = D // 2

    def est_vmem(tk):
        # double-buffered xh + w + bias tiles, double-buffered f32 out tile
        return (2 * (tm * tk * act_bytes + tk * tn * act_bytes + tn * 4)
                + 2 * tm * tn * 4)

    budget = 40 * 1024 * 1024          # fits v7x's 64 MiB physical VMEM
    tk = K                             # collapse the reduction axis if we can
    if est_vmem(tk) > budget:
        tk = 2048
        while tk > 128 and est_vmem(tk) > budget:
            tk //= 2
    return tm, tn, tk


# --------------------------------------------------------------------------
# Forward pass
# --------------------------------------------------------------------------
def gated_recurrent_unit_fused(x, hidden, w_fused, b_fused):
    """x, hidden: (N, D).  w_fused: (2D, D), b_fused: (1, D) from
    fuse_gru_params().  Returns (N, D) in x.dtype."""
    N, D = x.shape
    K = 2 * D
    assert w_fused.shape == (K, D) and b_fused.shape == (1, D)

    act_dtype = w_fused.dtype
    # One concat + cast pass over the (small) activations; relu stays in-kernel.
    xh = jnp.concatenate([x, hidden], axis=-1).astype(act_dtype)      # (N, 2D)

    tm, tn, tk = _choose_tiles(N, D, K, jnp.dtype(act_dtype).itemsize)

    if tk != K and K % tk != 0:
        # Zero-pad the contraction so the reduction tail never accumulates
        # unspecified data (relu(0) @ 0 == 0).
        kp = pl.cdiv(K, tk) * tk
        xh = jnp.pad(xh, ((0, 0), (0, kp - K)))
        w_fused = jnp.pad(w_fused, ((0, kp - K), (0, 0)))
        K = kp

    out_shape = jax.ShapeDtypeStruct((N, D), x.dtype)

    if tk == K:
        grid = (pl.cdiv(N, tm), pl.cdiv(D, tn))
        grid_spec = pltpu.PrefetchScalarGridSpec(
            num_scalar_prefetch=0,
            grid=grid,
            in_specs=[
                pl.BlockSpec((tm, K), lambda i, j: (i, 0)),
                pl.BlockSpec((K, tn), lambda i, j: (0, j)),
                pl.BlockSpec((1, tn), lambda i, j: (0, j)),
            ],
            out_specs=pl.BlockSpec((tm, tn), lambda i, j: (i, j)),
        )
        kernel = _gru_kernel_fullk
        dim_sem = ("parallel", "parallel")
    else:
        grid = (pl.cdiv(N, tm), pl.cdiv(D, tn), K // tk)
        grid_spec = pltpu.PrefetchScalarGridSpec(
            num_scalar_prefetch=0,
            grid=grid,
            in_specs=[
                pl.BlockSpec((tm, tk), lambda i, j, k: (i, k)),
                pl.BlockSpec((tk, tn), lambda i, j, k: (k, j)),
                pl.BlockSpec((1, tn), lambda i, j, k: (0, j)),
            ],
            out_specs=pl.BlockSpec((tm, tn), lambda i, j, k: (i, j)),
        )
        kernel = _gru_kernel_ktiled
        dim_sem = ("parallel", "parallel", "arbitrary")

    return pl.pallas_call(
        kernel,
        out_shape=out_shape,
        grid_spec=grid_spec,
        compiler_params=pltpu.CompilerParams(
            dimension_semantics=dim_sem,
            vmem_limit_bytes=48 * 1024 * 1024,   # < 64 MiB physical on v7x
        ),
    )(xh, w_fused, b_fused)


def gated_recurrent_unit(x, hidden, w_ih, b_ih, w_hh, b_hh,
                         *, weight_dtype=jnp.bfloat16):
    """Convenience one-shot wrapper.  For repeated calls (e.g. a GRU time
    loop) call fuse_gru_params() ONCE and reuse gated_recurrent_unit_fused."""
    w_fused, b_fused = fuse_gru_params(w_ih, b_ih, w_hh, b_hh, weight_dtype)
    return gated_recurrent_unit_fused(x, hidden, w_fused, b_fused)


# --------------------------------------------------------------------------
# Demo / correctness check
# --------------------------------------------------------------------------
if __name__ == "__main__":
    key = jax.random.PRNGKey(0)
    N, D = 8, 128  # batch, fea_size

    k_x, k_h, k_wih, k_bih, k_whh, k_bhh = jax.random.split(key, 6)

    x = jax.random.normal(k_x, (N, D), dtype=jnp.float32)
    hidden = jax.random.normal(k_h, (N, D), dtype=jnp.float32)

    # PyTorch nn.Linear-style uniform init; weights stored pre-transposed
    # as (D_in, D_out) so y = x @ W + b.
    bound = 1.0 / (D ** 0.5)
    w_ih = jax.random.uniform(k_wih, (D, D), jnp.float32, -bound, bound)
    b_ih = jax.random.uniform(k_bih, (1, D), jnp.float32, -bound, bound)
    w_hh = jax.random.uniform(k_whh, (D, D), jnp.float32, -bound, bound)
    b_hh = jax.random.uniform(k_bhh, (1, D), jnp.float32, -bound, bound)

    # Fusion hoisted out of the "step" call (done once).
    w_fused, b_fused = fuse_gru_params(w_ih, b_ih, w_hh, b_hh)

    out = gated_recurrent_unit_fused(x, hidden, w_fused, b_fused)
    out = jax.block_until_ready(out)

    # Pure-JAX f32 reference (same eval-mode semantics as the PyTorch module).
    # Tolerance loosened because the kernel streams bf16 weights/activations
    # into the MXU (f32 accumulation).
    ref = (jnp.maximum(x, 0.0) @ w_ih + b_ih) + (jnp.maximum(hidden, 0.0) @ w_hh + b_hh)
    assert out.shape == ref.shape
    assert jnp.allclose(out, ref, atol=5e-2, rtol=5e-2), "mismatch vs reference"

    print("KERNEL_OK")
</pallas_src>

<mosaic_0001>
module attributes {stable_mosaic.version = 11 : i64} {
  func.func @_gru_kernel_fullk(%arg0: i32, %arg1: i32, %arg2: memref<8x256xbf16, #tpu.memory_space<vmem>>, %arg3: memref<256x128xbf16, #tpu.memory_space<vmem>>, %arg4: memref<1x128xf32, #tpu.memory_space<vmem>>, %arg5: memref<8x128xf32, #tpu.memory_space<vmem>>) attributes {dimension_semantics = [#tpu.dimension_semantics<parallel>, #tpu.dimension_semantics<parallel>], iteration_bounds = array<i64: 1, 1>, scalar_prefetch = 0 : i64, scratch_operands = 0 : i64, tpu.core_type = #tpu.core_type<tc>, window_params = [{transform_indices = @transform_0, window_bounds = array<i64: 8, 256>}, {transform_indices = @transform_1, window_bounds = array<i64: 256, 128>}, {transform_indices = @transform_2, window_bounds = array<i64: 1, 128>}, {transform_indices = @transform_3, window_bounds = array<i64: 8, 128>}]} {
    %c0 = arith.constant 0 : index
    %c0_0 = arith.constant 0 : index
    %0 = vector.load %arg2[%c0, %c0_0] : memref<8x256xbf16, #tpu.memory_space<vmem>>, vector<8x256xbf16>
    %cst = arith.constant 0.000000e+00 : bf16
    %1 = vector.broadcast %cst : bf16 to vector<8x256xbf16>
    %2 = arith.maximumf %0, %1 : vector<8x256xbf16>
    %c0_1 = arith.constant 0 : index
    %c0_2 = arith.constant 0 : index
    %3 = vector.load %arg3[%c0_1, %c0_2] : memref<256x128xbf16, #tpu.memory_space<vmem>>, vector<256x128xbf16>
    %cst_3 = arith.constant dense<0.000000e+00> : vector<8x128xf32>
    %4 = tpu.matmul %2, %3, %cst_3 {dimension_numbers = #tpu.dot_dimension_numbers<[1], [0], [0], [1], [0, 0, 1, 1], [], []>} : vector<8x256xbf16>, vector<256x128xbf16>, vector<8x128xf32> -> vector<8x128xf32>
    %c0_4 = arith.constant 0 : index
    %c0_5 = arith.constant 0 : index
    %5 = vector.load %arg4[%c0_4, %c0_5] : memref<1x128xf32, #tpu.memory_space<vmem>>, vector<1x128xf32>
    %6 = vector.broadcast %5 : vector<1x128xf32> to vector<8x128xf32>
    %7 = arith.addf %4, %6 : vector<8x128xf32>
    %c0_6 = arith.constant 0 : index
    %c0_7 = arith.constant 0 : index
    %8 = vector.load %arg5[%c0_6, %c0_7] : memref<8x128xf32, #tpu.memory_space<vmem>>, vector<8x128xf32>
    tpu.vector_store %arg5[%c0_6, %c0_7], %7 {strides = array<i32>} : memref<8x128xf32, #tpu.memory_space<vmem>>, vector<8x128xf32>,
    return
  }
  func.func @transform_0(%arg0: i32, %arg1: i32) -> (i32, i32) {
    %c0_i32 = arith.constant 0 : i32
    %c0_i32_0 = arith.constant 0 : i32
    return %arg0, %c0_i32 : i32, i32
  }
  func.func @transform_1(%arg0: i32, %arg1: i32) -> (i32, i32) {
    %c0_i32 = arith.constant 0 : i32
    %c0_i32_0 = arith.constant 0 : i32
    return %c0_i32, %arg1 : i32, i32
  }
  func.func @transform_2(%arg0: i32, %arg1: i32) -> (i32, i32) {
    %c0_i32 = arith.constant 0 : i32
    %c0_i32_0 = arith.constant 0 : i32
    return %c0_i32, %arg1 : i32, i32
  }
  func.func @transform_3(%arg0: i32, %arg1: i32) -> (i32, i32) {
    %c0_i32 = arith.constant 0 : i32
    return %arg0, %arg1 : i32, i32
  }
}

</mosaic_0001>

<llo_original>
// kernel: tpu_custom_call.1
$region0: #{tpu_custom_call.1}
  #allocation0 [shape = 'u32[]', space=smem, size = 0x4, offset = 0x4, fixed_abs, tag = 'smem constant byte address 0x4 - core index']
  #allocation1 [shape = 'u32[144,128]{1,0:T(1,128)}', space=vmem, size = 0x12000, scoped, tag = 'internal scratch']
  %s0 = inlined_call_operand.hbm [shape: bf16[8,256], index: 0, kind: input, shape index: {}]
  %s1 = inlined_call_operand.hbm [shape: bf16[256,128], index: 1, kind: input, shape index: {}]
  %s2 = inlined_call_operand.vmem [shape: f32[1,128], index: 2, kind: input, shape index: {}]
  %s3 = inlined_call_operand.hbm [shape: f32[8,128], index: 3, kind: output, shape index: {}]
  %s4 = sld [smem:[#allocation0]]
  $region30: #{tpu_custom_call.1} parent=0
    _
  %s6 = ssub.s32 1, %s4
  %s7 = scalar_select 0, %s6, %s4
  $region1: #{tpu_custom_call.1} parent=0
    #allocation2 [shape = 'u8[4096]{0}', space=vmem, size = 0x1000, scoped, tag = 'input window, operand 0, single buffered']
    #allocation3 [shape = 's32[1]{0}', space=sflag, size = 0x4, scoped, tag = 'scoped memory for tpu_custom_call.1']
    #allocation4 [shape = 's32[1]{0}', space=sflag, size = 0x4, scoped, tag = 'scoped memory for tpu_custom_call.1']
    #allocation5 [shape = 'u8[65536]{0}', space=vmem, size = 0x10000, scoped, tag = 'input window, operand 1, single buffered']
    #allocation6 [shape = 's32[1]{0}', space=sflag, size = 0x4, scoped, tag = 'scoped memory for tpu_custom_call.1']
    #allocation7 [shape = 'u8[4096]{0}', space=vmem, size = 0x1000, scoped, tag = 'output window, operand 0, single buffered']
    %8 = vsyncpa [#allocation3], 0
    %9 = vsyncpa [#allocation6], 0
    %10 = vsyncpa [#allocation4], 0
    // Predicated region
    $region2: #{tpu_custom_call.1} parent=1 // pred_check
      _
    $region3: #{tpu_custom_call.1} parent=1 // pred_check_branch
      %12 = sbr.rel (0) target = $region5
    $region4: #{tpu_custom_call.1} parent=1 // pred_region
      %s14 = ssub.s32 128, 128
      %15 = vsyncadd [#allocation3], %s14
      %s17 = sshll.u32 [#allocation2], 4
      %s18 = int_to_ptr.vmem [resolvable:$true] %s17
      %20 = dma.hbm_to_vmem [thread:$0]  %s0, 128, %s18, [#allocation3]
    $region5: #{tpu_custom_call.1} parent=1 // pred_fallthru
      _
    // Predicated region
    $region6: #{tpu_custom_call.1} parent=1 // pred_check
      _
    $region7: #{tpu_custom_call.1} parent=1 // pred_check_branch
      %22 = sbr.rel (0) target = $region9
    $region8: #{tpu_custom_call.1} parent=1 // pred_region
      %s24 = ssub.s32 2048, 2048
      %25 = vsyncadd [#allocation6], %s24
      %s26 = sshll.u32 [#allocation5], 4
      %s27 = int_to_ptr.vmem [resolvable:$true] %s26
      %32 = dma.hbm_to_vmem [thread:$0]  %s1, 2048, %s27, [#allocation6], 64, 64, 4
    $region9: #{tpu_custom_call.1} parent=1 // pred_fallthru
      _
    // Predicated region
    $region10: #{tpu_custom_call.1} parent=1 // pred_check
      _
    $region11: #{tpu_custom_call.1} parent=1 // pred_check_branch
      %34 = sbr.rel (0) target = $region13
    $region12: #{tpu_custom_call.1} parent=1 // pred_region
      _
    $region13: #{tpu_custom_call.1} parent=1 // pred_fallthru
      _
    // Predicated region
    $region14: #{tpu_custom_call.1} parent=1 // pred_check
      _
    $region15: #{tpu_custom_call.1} parent=1 // pred_check_branch
      %36 = sbr.rel (0) target = $region17
    $region16: #{tpu_custom_call.1} parent=1 // pred_region
      %37 = dma.done [#allocation3], 128
    $region17: #{tpu_custom_call.1} parent=1 // pred_fallthru
      _
    // Predicated region
    $region18: #{tpu_custom_call.1} parent=1 // pred_check
      _
    $region19: #{tpu_custom_call.1} parent=1 // pred_check_branch
      %39 = sbr.rel (0) target = $region21
    $region20: #{tpu_custom_call.1} parent=1 // pred_region
      %40 = dma.done [#allocation6], 2048
    $region21: #{tpu_custom_call.1} parent=1 // pred_fallthru
      _
    %v42 = vld [vmem:[#allocation2] sm:$0xff]
    %v43 = vmax.bf16 %v42, 0
    %v44 = vld [vmem:[#allocation5] sm:$0xf]
    %v45 = vld [vmem:[#allocation5 + $0x4] sm:$0xf]
    %v46 = vld [vmem:[#allocation5 + $0x8] sm:$0xf]
    %v47 = vld [vmem:[#allocation5 + $0xc] sm:$0xf]
    %v48 = vld [vmem:[#allocation5 + $0x10] sm:$0xf]
    %v49 = vld [vmem:[#allocation5 + $0x14] sm:$0xf]
    %v50 = vld [vmem:[#allocation5 + $0x18] sm:$0xf]
    %v51 = vld [vmem:[#allocation5 + $0x1c] sm:$0xf]
    %v52 = vld [vmem:[#allocation5 + $0x20] sm:$0xf]
    %v53 = vld [vmem:[#allocation5 + $0x24] sm:$0xf]
    %v54 = vld [vmem:[#allocation5 + $0x28] sm:$0xf]
    %v55 = vld [vmem:[#allocation5 + $0x2c] sm:$0xf]
    %v56 = vld [vmem:[#allocation5 + $0x30] sm:$0xf]
    %v57 = vld [vmem:[#allocation5 + $0x34] sm:$0xf]
    %v58 = vld [vmem:[#allocation5 + $0x38] sm:$0xf]
    %v59 = vld [vmem:[#allocation5 + $0x3c] sm:$0xf]
    %v60 = vld [vmem:[#allocation5 + $0x40] sm:$0xf]
    %v61 = vld [vmem:[#allocation5 + $0x44] sm:$0xf]
    %v62 = vld [vmem:[#allocation5 + $0x48] sm:$0xf]
    %v63 = vld [vmem:[#allocation5 + $0x4c] sm:$0xf]
    %v64 = vld [vmem:[#allocation5 + $0x50] sm:$0xf]
    %v65 = vld [vmem:[#allocation5 + $0x54] sm:$0xf]
    %v66 = vld [vmem:[#allocation5 + $0x58] sm:$0xf]
    %v67 = vld [vmem:[#allocation5 + $0x5c] sm:$0xf]
    %v68 = vld [vmem:[#allocation5 + $0x60] sm:$0xf]
    %v69 = vld [vmem:[#allocation5 + $0x64] sm:$0xf]
    %v70 = vld [vmem:[#allocation5 + $0x68] sm:$0xf]
    %v71 = vld [vmem:[#allocation5 + $0x6c] sm:$0xf]
    %v72 = vld [vmem:[#allocation5 + $0x70] sm:$0xf]
    %v73 = vld [vmem:[#allocation5 + $0x74] sm:$0xf]
    %v74 = vld [vmem:[#allocation5 + $0x78] sm:$0xf]
    %v75 = vld [vmem:[#allocation5 + $0x7c] sm:$0xf]
    %v76 = vld [vmem:[%s2] sm:$0x1]
    %v78 = vlaneseq
    %v79 = vshrl.u32 %v78, 7
    %v80 = vsub.s32 0, %v79
    %v81 = vrot.slane %v76, %v80
    %v84 = vunpack.c.l.b16 %v43
    %v85 = vunpack.c.h.b16 %v43
    %v86 = vpack.c.b16 %v84, %v84
    %v87 = vpack.c.b16 %v85, %v85
    %v122 = vunpack.c.l.b16 %v44
    %v123 = vunpack.c.l.b16 %v45
    %v124 = vunpack.c.l.b16 %v46
    %v125 = vunpack.c.l.b16 %v47
    %v126 = vunpack.c.l.b16 %v48
    %v127 = vunpack.c.l.b16 %v49
    %v128 = vunpack.c.l.b16 %v50
    %v129 = vunpack.c.l.b16 %v51
    %v130 = vunpack.c.l.b16 %v52
    %v131 = vunpack.c.l.b16 %v53
    %v132 = vunpack.c.l.b16 %v54
    %v133 = vunpack.c.l.b16 %v55
    %v134 = vunpack.c.l.b16 %v56
    %v135 = vunpack.c.l.b16 %v57
    %v136 = vunpack.c.l.b16 %v58
    %v137 = vunpack.c.l.b16 %v59
    %v138 = vunpack.c.l.b16 %v60
    %v139 = vunpack.c.l.b16 %v61
    %v140 = vunpack.c.l.b16 %v62
    %v141 = vunpack.c.l.b16 %v63
    %v142 = vunpack.c.l.b16 %v64
    %v143 = vunpack.c.l.b16 %v65
    %v144 = vunpack.c.l.b16 %v66
    %v145 = vunpack.c.l.b16 %v67
    %v146 = vunpack.c.l.b16 %v68
    %v147 = vunpack.c.l.b16 %v69
    %v148 = vunpack.c.l.b16 %v70
    %v149 = vunpack.c.l.b16 %v71
    %v150 = vunpack.c.l.b16 %v72
    %v151 = vunpack.c.l.b16 %v73
    %v152 = vunpack.c.l.b16 %v74
    %v153 = vunpack.c.l.b16 %v75
    %v154 = vpack.c.b16 %v123, %v122
    %v155 = vpack.c.b16 %v125, %v124
    %v156 = vpack.c.b16 %v127, %v126
    %v157 = vpack.c.b16 %v129, %v128
    %v158 = vpack.c.b16 %v131, %v130
    %v159 = vpack.c.b16 %v133, %v132
    %v160 = vpack.c.b16 %v135, %v134
    %v161 = vpack.c.b16 %v137, %v136
    %v162 = vpack.c.b16 %v139, %v138
    %v163 = vpack.c.b16 %v141, %v140
    %v164 = vpack.c.b16 %v143, %v142
    %v165 = vpack.c.b16 %v145, %v144
    %v166 = vpack.c.b16 %v147, %v146
    %v167 = vpack.c.b16 %v149, %v148
    %v168 = vpack.c.b16 %v151, %v150
    %v169 = vpack.c.b16 %v153, %v152
    %186 = vmatprep.subr.bf16.mxu0 0
    %187 = vmatpush1.bf16.msra.mxu0 %v154
    %188 = vmatprep.subr.bf16.mxu0 0
    %189 = vmatpush1.bf16.msra.mxu0 %v155
    %190 = vmatprep.subr.bf16.mxu0 0
    %191 = vmatpush1.bf16.msra.mxu0 %v156
    %192 = vmatprep.subr.bf16.mxu0 0
    %193 = vmatpush1.bf16.msra.mxu0 %v157
    %194 = vmatprep.subr.bf16.mxu0 0
    %195 = vmatpush1.bf16.msra.mxu0 %v158
    %196 = vmatprep.subr.bf16.mxu0 0
    %197 = vmatpush1.bf16.msra.mxu0 %v159
    %198 = vmatprep.subr.bf16.mxu0 0
    %199 = vmatpush1.bf16.msra.mxu0 %v160
    %200 = vmatprep.subr.bf16.mxu0 0
    %201 = vmatpush1.bf16.msra.mxu0 %v161
    %202 = vmatprep.subr.bf16.mxu0 0
    %203 = vmatpush1.bf16.msra.mxu0 %v162
    %204 = vmatprep.subr.bf16.mxu0 0
    %205 = vmatpush1.bf16.msra.mxu0 %v163
    %206 = vmatprep.subr.bf16.mxu0 0
    %207 = vmatpush1.bf16.msra.mxu0 %v164
    %208 = vmatprep.subr.bf16.mxu0 0
    %209 = vmatpush1.bf16.msra.mxu0 %v165
    %210 = vmatprep.subr.bf16.mxu0 0
    %211 = vmatpush1.bf16.msra.mxu0 %v166
    %212 = vmatprep.subr.bf16.mxu0 0
    %213 = vmatpush1.bf16.msra.mxu0 %v167
    %214 = vmatprep.subr.bf16.mxu0 0
    %215 = vmatpush1.bf16.msra.mxu0 %v168
    %216 = vmatprep.subr.bf16.mxu0 0
    %217 = vmatpush1.bf16.msra.mxu0 %v169
    %218 = vmatprep.mubr.bf16.mxu0 %v87
    %219 = vmatmul.mubr.bf16.gmra.mrb[0].mxu0 %v86
    %v220 = vpop.f32.mrb[0].mxu0
    %v221 = vadd.f32 %v81, %v220
    %v222 = vpop.f32.mrb[0].mxu0
    %v223 = vpop.f32.mrb[0].mxu0
    %v224 = vpop.f32.mrb[0].mxu0
    %225 = vdwg.mxu0
    %226 = vst [vmem:[#allocation7] sm:$0xff] %v221
    // Predicated region
    $region22: #{tpu_custom_call.1} parent=1 // pred_check
      _
    $region23: #{tpu_custom_call.1} parent=1 // pred_check_branch
      %228 = sbr.rel (0) target = $region25
    $region24: #{tpu_custom_call.1} parent=1 // pred_region
      %s230 = ssub.s32 128, 128
      %231 = vsyncadd [#allocation4], %s230
      %s233 = sshll.u32 [#allocation7], 4
      %s234 = int_to_ptr.vmem [resolvable:$true] %s233
      %236 = dma.vmem_to_hbm [thread:$0]  %s234, 128, %s3, [#allocation4]
    $region25: #{tpu_custom_call.1} parent=1 // pred_fallthru
      _
    // Predicated region
    $region26: #{tpu_custom_call.1} parent=1 // pred_check
      _
    $region27: #{tpu_custom_call.1} parent=1 // pred_check_branch
      %238 = sbr.rel (0) target = $region29
    $region28: #{tpu_custom_call.1} parent=1 // pred_region
      %239 = dma.done [#allocation4], 128
    $region29: #{tpu_custom_call.1} parent=1 // pred_fallthru
      _
    %240 = vsyncpa [#allocation3], 1
    %241 = vsyncpa [#allocation6], 1
    %242 = vsyncpa [#allocation4], 1

</llo_original>
